<compile_context>
chip_gen: v7x
topology: tpu7x:2x2x1
jax: 0.10.0
libtpu: 0.0.40
codegen_flags: <defaults>
</compile_context>

<pallas_src>
import jax
import jax.numpy as jnp
from jax import lax
from jax.experimental import pallas as pl
from jax.experimental.pallas import tpu as pltpu


def _nce_row_loss_kernel(x_ref, label_ref, out_ref):
    # x_ref:     (TB, C) logits (original dtype) in VMEM
    # label_ref: (TB, 1) int32 target class per row in VMEM
    # out_ref:   (TB, 1) float32 per-row cross-entropy loss
    x = x_ref[...].astype(jnp.float32)                     # cast after VMEM load
    labels = label_ref[...]                                # (TB, 1)
    tb, c = x.shape

    row_max = jnp.max(x, axis=1, keepdims=True)            # (TB, 1)   XLU
    shifted = x - row_max                                  # (TB, C)   VPU
    sum_exp = jnp.sum(jnp.exp(shifted), axis=1, keepdims=True)  # EUP + XLU

    # One-hot gather of the target logit (done on `shifted`; row_max cancels).
    col_ids = lax.broadcasted_iota(jnp.int32, (tb, c), 1)
    onehot = col_ids == labels
    picked_shifted = jnp.sum(jnp.where(onehot, shifted, 0.0), axis=1, keepdims=True)

    out_ref[...] = jnp.log(sum_exp) - picked_shifted       # (TB, 1)


def _round_up(n, m):
    return ((n + m - 1) // m) * m


def nce_softmax_loss(x, label, *, tile_vmem_budget_bytes=20 * 1024 * 1024):
    """x: (bsz, num_classes, 1) float; label: (bsz,) int. Returns scalar mean CE loss."""
    # torch .squeeze(): for the expected (B, C, 1) input this drops the trailing unit dim.
    if x.ndim == 3 and x.shape[-1] == 1:
        x2d = jnp.squeeze(x, axis=-1)
    else:
        x2d = jnp.reshape(x, (x.shape[0], -1))
    b, c = x2d.shape
    labels2d = label.astype(jnp.int32).reshape(b, 1)

    # Batch tile size: a multiple of the sublane packing for this dtype, sized
    # so the double-buffered logits tile stays within the VMEM budget
    # (conservative enough for v7x's 64 MiB VMEM; v6e/v5e have more headroom).
    itemsize = jnp.dtype(x2d.dtype).itemsize
    sub = max(8, 32 // itemsize)                   # 8 for f32, 16 for bf16
    tb = tile_vmem_budget_bytes // (2 * c * itemsize)
    tb = max(sub, min(1024, (tb // sub) * sub))
    tb = min(tb, _round_up(b, sub))

    b_pad = _round_up(b, tb)
    if b_pad != b:
        x2d = jnp.pad(x2d, ((0, b_pad - b), (0, 0)))
        labels2d = jnp.pad(labels2d, ((0, b_pad - b), (0, 0)))
    num_tiles = b_pad // tb

    per_row = pl.pallas_call(
        _nce_row_loss_kernel,
        out_shape=jax.ShapeDtypeStruct((b_pad, 1), jnp.float32),
        grid_spec=pltpu.PrefetchScalarGridSpec(
            num_scalar_prefetch=0,
            grid=(num_tiles,),
            in_specs=[
                pl.BlockSpec((tb, c), lambda i: (i, 0)),   # logits tile (full C on lanes)
                pl.BlockSpec((tb, 1), lambda i: (i, 0)),   # labels tile
            ],
            out_specs=pl.BlockSpec((tb, 1), lambda i: (i, 0)),
        ),
        compiler_params=pltpu.CompilerParams(
            dimension_semantics=("parallel",),             # independent tiles -> 2 TCs on v7x
            vmem_limit_bytes=32 * 1024 * 1024,
        ),
    )(x2d, labels2d)

    # Mean over the valid rows only (padded rows sliced away); the divide is a
    # trivial JAX-side epilogue.
    return jnp.sum(per_row[:b, 0]) / b


def _reference_loss(x, label):
    # Pure-JAX reference: CrossEntropyLoss with mean reduction.
    x2d = jnp.squeeze(x, axis=-1).astype(jnp.float32)
    logz = jax.nn.logsumexp(x2d, axis=1)
    picked = jnp.take_along_axis(x2d, label[:, None].astype(jnp.int32), axis=1)[:, 0]
    return jnp.mean(logz - picked)


if __name__ == "__main__":
    key = jax.random.PRNGKey(0)
    kx, kl, kx2, kl2 = jax.random.split(key, 4)

    # Case 1: (bsz, num_classes, 1) float32 — the NCE head output shape.
    bsz, num_classes = 8, 32
    x = jax.random.normal(kx, (bsz, num_classes, 1), dtype=jnp.float32)
    label = jax.random.randint(kl, (bsz,), 0, num_classes, dtype=jnp.int32)
    loss = nce_softmax_loss(x, label)
    jax.block_until_ready(loss)
    ref = _reference_loss(x, label)
    assert jnp.allclose(loss, ref, rtol=1e-5, atol=1e-5), (loss, ref)

    # Case 2: bf16 logits, batch not a multiple of the tile (exercises padding
    # and the no-wrapper-upcast path).
    bsz2, num_classes2 = 12, 200
    x2 = jax.random.normal(kx2, (bsz2, num_classes2, 1), dtype=jnp.bfloat16)
    label2 = jax.random.randint(kl2, (bsz2,), 0, num_classes2, dtype=jnp.int32)
    loss2 = nce_softmax_loss(x2, label2)
    jax.block_until_ready(loss2)
    ref2 = _reference_loss(x2, label2)
    assert jnp.allclose(loss2, ref2, rtol=1e-4, atol=1e-4), (loss2, ref2)

    print("KERNEL_OK")
</pallas_src>

<mosaic_0001>
module attributes {stable_mosaic.version = 11 : i64} {
  func.func @_nce_row_loss_kernel(%arg0: i32, %arg1: memref<8x32xf32, #tpu.memory_space<vmem>>, %arg2: memref<8x1xi32, #tpu.memory_space<vmem>>, %arg3: memref<8x1xf32, #tpu.memory_space<vmem>>) attributes {dimension_semantics = [#tpu.dimension_semantics<parallel>], iteration_bounds = array<i64: 1>, scalar_prefetch = 0 : i64, scratch_operands = 0 : i64, tpu.core_type = #tpu.core_type<tc>, window_params = [{transform_indices = @transform_0, window_bounds = array<i64: 8, 32>}, {transform_indices = @transform_1, window_bounds = array<i64: 8, 1>}, {transform_indices = @transform_2, window_bounds = array<i64: 8, 1>}]} {
    %c0 = arith.constant 0 : index
    %c0_0 = arith.constant 0 : index
    %0 = vector.load %arg1[%c0, %c0_0] : memref<8x32xf32, #tpu.memory_space<vmem>>, vector<8x32xf32>
    %c0_1 = arith.constant 0 : index
    %c0_2 = arith.constant 0 : index
    %1 = vector.load %arg2[%c0_1, %c0_2] : memref<8x1xi32, #tpu.memory_space<vmem>>, vector<8x1xi32>
    %cst = arith.constant dense<0xFF800000> : vector<8xf32>
    %2 = vector.multi_reduction <maximumf>, %0, %cst [1] : vector<8x32xf32> to vector<8xf32>
    %3 = vector.shape_cast %2 : vector<8xf32> to vector<8x1xf32>
    %4 = vector.broadcast %3 : vector<8x1xf32> to vector<8x32xf32>
    %5 = arith.subf %0, %4 : vector<8x32xf32>
    %6 = math.exp %5 : vector<8x32xf32>
    %cst_3 = arith.constant dense<0.000000e+00> : vector<8xf32>
    %7 = vector.multi_reduction <add>, %6, %cst_3 [1] : vector<8x32xf32> to vector<8xf32>
    %8 = vector.shape_cast %7 : vector<8xf32> to vector<8x1xf32>
    %9 = tpu.iota {dimensions = array<i32: 1>} : vector<8x32xi32>
    %10 = vector.broadcast %1 : vector<8x1xi32> to vector<8x32xi32>
    %11 = arith.cmpi eq, %9, %10 : vector<8x32xi32>
    %cst_4 = arith.constant 0.000000e+00 : f32
    %12 = vector.broadcast %cst_4 : f32 to vector<8x32xf32>
    %13 = arith.select %11, %5, %12 : vector<8x32xi1>, vector<8x32xf32>
    %cst_5 = arith.constant dense<0.000000e+00> : vector<8xf32>
    %14 = vector.multi_reduction <add>, %13, %cst_5 [1] : vector<8x32xf32> to vector<8xf32>
    %15 = vector.shape_cast %14 : vector<8xf32> to vector<8x1xf32>
    %16 = math.log %8 : vector<8x1xf32>
    %17 = arith.subf %16, %15 : vector<8x1xf32>
    %c0_6 = arith.constant 0 : index
    %c0_7 = arith.constant 0 : index
    %18 = vector.load %arg3[%c0_6, %c0_7] : memref<8x1xf32, #tpu.memory_space<vmem>>, vector<8x1xf32>
    tpu.vector_store %arg3[%c0_6, %c0_7], %17 {strides = array<i32>} : memref<8x1xf32, #tpu.memory_space<vmem>>, vector<8x1xf32>,
    return
  }
  func.func @transform_0(%arg0: i32) -> (i32, i32) {
    %c0_i32 = arith.constant 0 : i32
    %c0_i32_0 = arith.constant 0 : i32
    return %arg0, %c0_i32 : i32, i32
  }
  func.func @transform_1(%arg0: i32) -> (i32, i32) {
    %c0_i32 = arith.constant 0 : i32
    %c0_i32_0 = arith.constant 0 : i32
    return %arg0, %c0_i32 : i32, i32
  }
  func.func @transform_2(%arg0: i32) -> (i32, i32) {
    %c0_i32 = arith.constant 0 : i32
    %c0_i32_0 = arith.constant 0 : i32
    return %arg0, %c0_i32 : i32, i32
  }
}

</mosaic_0001>

<llo_original>
// kernel: tpu_custom_call.1
$region0: #{tpu_custom_call.1}
  #allocation0 [shape = 'u32[]', space=smem, size = 0x4, offset = 0x4, fixed_abs, tag = 'smem constant byte address 0x4 - core index']
  #allocation1 [shape = 'u32[144,128]{1,0:T(1,128)}', space=vmem, size = 0x12000, scoped, tag = 'internal scratch']
  %s0 = inlined_call_operand.vmem [shape: f32[8,32], index: 0, kind: input, shape index: {}]
  %s1 = inlined_call_operand.vmem [shape: s32[8,1], index: 1, kind: input, shape index: {}]
  %s2 = inlined_call_operand.vmem [shape: f32[8,1], index: 2, kind: output, shape index: {}]
  %s3 = sld [smem:[#allocation0]]
  $region18: #{tpu_custom_call.1} parent=0
    _
  %s5 = ssub.s32 1, %s3
  %s6 = scalar_select 0, %s5, %s3
  // Predicated region
  $region2: #{tpu_custom_call.1} parent=0 // pred_check
    _
  $region3: #{tpu_custom_call.1} parent=0 // pred_check_branch
    %8 = sbr.rel (0) target = $region5
  $region4: #{tpu_custom_call.1} parent=0 // pred_region
    _
  $region5: #{tpu_custom_call.1} parent=0 // pred_fallthru
    _
  // Predicated region
  $region6: #{tpu_custom_call.1} parent=0 // pred_check
    _
  $region7: #{tpu_custom_call.1} parent=0 // pred_check_branch
    %10 = sbr.rel (0) target = $region9
  $region8: #{tpu_custom_call.1} parent=0 // pred_region
    _
  $region9: #{tpu_custom_call.1} parent=0 // pred_fallthru
    _
  %v11 = vld [vmem:[%s0] sm:$0xff]
  %v12 = vld [vmem:[%s1] sm:$0xff]
  %vm13 = vcmask 261120
  %v14 = vsel %vm13, %v11, -inf
  %15 = vmax.xlane.f32.xlu0 %v14
  %v16 = vpop.xlane.xlu0 %15
  %v17 = vsub.f32 %v11, %v16
  %v18 = vmul.f32 %v17, 1.442695
  %v19 = vpow.pop %v18
  %v20 = vsel %vm13, %v19, 0.0
  %21 = vadd.xlane.f32.xlu0 %v20
  %v22 = vpop.xlane.xlu0 %21
  %v23 = vlaneseq
  %v24 = vand.u32 %v23, 127
  %25 = vset.pattern.permute.xlu0 0
  %26 = vperm.xlu0 %25, %v12
  %v27 = vpop.permute.xlu0 %26
  %vm28 = vcmp.eq.s32.totalorder %v24, %v27
  %v29 = vsel %vm28, %v17, 0.0
  %v30 = vsel %vm13, %v29, 0.0
  %31 = vadd.xlane.f32.xlu0 %v30
  %v32 = vpop.xlane.xlu0 %31
  %v33 = vlog2.pop %v22
  %v34 = vmul.f32 %v33, 0.6931472
  %v35 = vsub.f32 %v34, %v32
  %vm36 = vcmask 7168
  %37 = vst.msk [vmem:[%s2] sm:$0xff] %vm36, %v35
  // Predicated region
  $region10: #{tpu_custom_call.1} parent=0 // pred_check
    _
  $region11: #{tpu_custom_call.1} parent=0 // pred_check_branch
    %39 = sbr.rel (0) target = $region13
  $region12: #{tpu_custom_call.1} parent=0 // pred_region
    _
  $region13: #{tpu_custom_call.1} parent=0 // pred_fallthru
    _
  // Predicated region
  $region14: #{tpu_custom_call.1} parent=0 // pred_check
    _
  $region15: #{tpu_custom_call.1} parent=0 // pred_check_branch
    %41 = sbr.rel (0) target = $region17
  $region16: #{tpu_custom_call.1} parent=0 // pred_region
    _
  $region17: #{tpu_custom_call.1} parent=0 // pred_fallthru
    _

</llo_original>
